<compile_context>
chip_gen: v5e
topology: v5e:2x2
jax: 0.10.0
libtpu: 0.0.40
codegen_flags: <defaults>
</compile_context>

<pallas_src>
import functools

import jax
import jax.numpy as jnp
from jax.experimental import pallas as pl
from jax.experimental.pallas import tpu as pltpu

_LANES = 128  # bins live on the lane axis (n_bins <= 128)


def _ece_kernel(temp_ref, logits_ref, labels_ref, hist_ref, *,
                onevsrest, n_bins, total_n, tile_n, tiles_per_chunk,
                needs_mask):
    chunk = pl.program_id(0)
    t = pl.program_id(1)

    # Per-chunk (8,128) histogram partial lives in the resident output block;
    # rows: 0=count, 1=sum(confidence), 2=sum(accuracy), 3..7 zero padding.
    @pl.when(t == 0)
    def _():
        hist_ref[...] = jnp.zeros_like(hist_ref)

    rows, c = logits_ref.shape  # (tile_n, C)

    # temperature scaling: multiply by a scalar reciprocal (no N*C divide)
    inv_t = 1.0 / temp_ref[0]
    x = logits_ref[...].astype(jnp.float32) * inv_t

    row_max = jnp.max(x, axis=1, keepdims=True)                    # (rows, 1)

    # confidences without materializing the probability matrix
    if onevsrest:
        sig = jax.nn.sigmoid(x)
        denom = jnp.sum(sig, axis=1, keepdims=True)
        conf = jax.nn.sigmoid(row_max) / denom                     # sigmoid monotone
    else:
        s = jnp.sum(jnp.exp(x - row_max), axis=1, keepdims=True)
        conf = 1.0 / s                                             # exact reciprocal

    # predictions = argmax(x) (monotone transforms preserve argmax); first-index tie-break
    class_iota = jax.lax.broadcasted_iota(jnp.int32, (rows, c), 1)
    preds = jnp.min(jnp.where(x == row_max, class_iota, jnp.int32(c)),
                    axis=1, keepdims=True)                         # (rows, 1)
    acc = (preds == labels_ref[...]).astype(jnp.float32)           # (rows, 1)

    # Padded rows (partial last tile / clamped overflow tiles): only emitted
    # when padding can exist. conf = -1 never falls into any bin and keeps the
    # MXU operand finite (garbage logits can produce NaN conf).
    if needs_mask:
        row0 = (chunk * tiles_per_chunk + t) * tile_n
        row_idx = row0 + jax.lax.broadcasted_iota(jnp.int32, (rows, 1), 0)
        conf = jnp.where(row_idx < total_n, conf, -1.0)

    # single-pass lane-dense binning: bin b covers (b/n_bins, (b+1)/n_bins]
    lane_f = jax.lax.broadcasted_iota(jnp.int32, (1, _LANES), 1).astype(jnp.float32)
    lo = lane_f / float(n_bins)
    hi = (lane_f + 1.0) / float(n_bins)   # lanes >= n_bins have lo >= 1.0 -> never match
    in_bin = jnp.logical_and(conf > lo, conf <= hi).astype(jnp.float32)  # (rows, 128)

    # Histogram on the otherwise-idle MXU: contract over rows.
    # vals = [ones | conf | acc | 0-pad] -> (rows, 8); result (8, 128).
    ones = jnp.ones_like(conf)
    vals = jnp.concatenate(
        [ones, conf, acc, jnp.zeros((rows, 5), jnp.float32)], axis=1)
    hist_ref[...] += jax.lax.dot_general(
        vals, in_bin, (((0,), (0,)), ((), ())),
        preferred_element_type=jnp.float32,
        precision=jax.lax.Precision.HIGHEST)


def ece_loss(logits, labels, temperature=1.0, onevsrest=False, n_bins=15,
             max_tile_rows=None, num_chunks=None):
    """Pallas implementation of ECELoss.forward. Returns a (1,) f32 array."""
    assert n_bins <= _LANES, "n_bins must fit on the 128-lane axis"
    N, C = logits.shape
    labels2 = labels.reshape(N, 1).astype(jnp.int32)
    temp = jnp.asarray([temperature], dtype=jnp.float32)

    itemsize = jnp.dtype(logits.dtype).itemsize
    # sublane multiple for the native input dtype: f32 -> 8, bf16 -> 16, int8/fp8 -> 32
    sub = max(8, 32 // itemsize)

    # chip-aware VMEM capacity (v5e/v6e: 128 MiB, v7x: 64 MiB per TensorCore)
    try:
        vmem_cap = int(pltpu.get_tpu_info().vmem_capacity_bytes)
    except Exception:
        vmem_cap = 64 * 1024 * 1024

    # Bytes-based tile sizing: per-row working set =
    #   2x double-buffered native-dtype logits row
    # + ~4 f32 (rows,C) intermediates (x, exp/sigmoid, iota, select)
    # + ~3 f32 (rows,128) binning temporaries + small (rows,1)/(rows,8) pieces.
    per_row_work = 16 * C + 1536
    per_row = 2 * C * itemsize + per_row_work
    tile_n = (8 * 1024 * 1024) // per_row
    tile_n = max(sub, (tile_n // sub) * sub)
    if max_tile_rows is not None:
        tile_n = max(sub, min(tile_n, (max_tile_rows // sub) * sub))
    if tile_n >= N:
        tile_n = N  # single full-extent block (legal even if N % sub != 0)

    tiles = pl.cdiv(N, tile_n)
    if num_chunks is None:
        # 2 chunks feed both TensorCores on v7x; on 1-TC chips the parallel
        # axis serializes and costs at most one fully-masked tile of work.
        num_chunks = 2 if tiles >= 8 else 1
    num_chunks = max(1, min(num_chunks, tiles))
    tiles_per_chunk = pl.cdiv(tiles, num_chunks)
    needs_mask = (num_chunks * tiles_per_chunk * tile_n) != N

    def row_map(ci, ti):
        # clamp overflow tiles of the last chunk to the final valid block;
        # their rows are masked out in-kernel via row_idx >= N.
        return (jnp.minimum(ci * tiles_per_chunk + ti, tiles - 1), 0)

    tile_bytes = tile_n * C * itemsize
    need = (2 * tile_bytes                # double-buffered logits tile
            + 2 * tile_n * 4              # double-buffered labels tile
            + tile_n * per_row_work       # in-kernel f32 intermediates
            + 2 * 8 * _LANES * 4          # output histogram block
            + (2 << 20))                  # headroom
    vmem_limit = int(min(vmem_cap * 3 // 4, max(32 * 1024 * 1024, need)))

    kernel = functools.partial(
        _ece_kernel, onevsrest=onevsrest, n_bins=n_bins, total_n=N,
        tile_n=tile_n, tiles_per_chunk=tiles_per_chunk, needs_mask=needs_mask)

    hist = pl.pallas_call(
        kernel,
        out_shape=jax.ShapeDtypeStruct((num_chunks, 8, _LANES), jnp.float32),
        grid_spec=pltpu.PrefetchScalarGridSpec(
            num_scalar_prefetch=0,
            grid=(num_chunks, tiles_per_chunk),
            in_specs=[
                pl.BlockSpec(memory_space=pltpu.MemorySpace.SMEM),   # temperature
                pl.BlockSpec((tile_n, C), row_map),                  # logits tile (native dtype)
                pl.BlockSpec((tile_n, 1), row_map),                  # labels tile
            ],
            out_specs=pl.BlockSpec((None, 8, _LANES),
                                   lambda ci, ti: (ci, 0, 0)),       # per-chunk partials
        ),
        compiler_params=pltpu.CompilerParams(
            dimension_semantics=("parallel", "arbitrary"),
            vmem_limit_bytes=vmem_limit,
        ),
    )(temp, logits, labels2)

    # ~n_bins-flop finalize in the wrapper (combines per-chunk/per-core partials)
    tot = jnp.sum(hist, axis=0)           # (8, 128)
    cnt, sconf, sacc = tot[0], tot[1], tot[2]
    safe = jnp.maximum(cnt, 1.0)
    gap = jnp.abs(sconf - sacc) / safe
    # mirrors `if prop_in_bin.item() > 0:` without data-dependent control flow
    ece = jnp.sum(jnp.where(cnt > 0.0, gap * cnt, 0.0)) / jnp.float32(N)
    return ece.reshape(1)


def ece_loss_ref(logits, labels, temperature=1.0, onevsrest=False, n_bins=15):
    """Pure-JAX reference mirroring the PyTorch module (for verification)."""
    x = logits.astype(jnp.float32) / temperature
    if onevsrest:
        sig = jax.nn.sigmoid(x)
        probs = sig / jnp.sum(sig, axis=1, keepdims=True)
    else:
        probs = jax.nn.softmax(x, axis=1)
    conf = jnp.max(probs, axis=1)
    preds = jnp.argmax(probs, axis=1)
    acc = (preds == labels).astype(jnp.float32)
    n = conf.shape[0]
    ece = jnp.float32(0.0)
    bounds = [i / n_bins for i in range(n_bins + 1)]
    for b in range(n_bins):
        in_bin = jnp.logical_and(conf > bounds[b], conf <= bounds[b + 1])
        cnt = jnp.sum(in_bin.astype(jnp.float32))
        prop = cnt / n
        safe = jnp.maximum(cnt, 1.0)
        acc_in = jnp.sum(jnp.where(in_bin, acc, 0.0)) / safe
        conf_in = jnp.sum(jnp.where(in_bin, conf, 0.0)) / safe
        ece = ece + jnp.where(cnt > 0.0, jnp.abs(conf_in - acc_in) * prop, 0.0)
    return ece.reshape(1)


if __name__ == "__main__":
    key = jax.random.PRNGKey(0)
    k_logits, k_labels = jax.random.split(key)

    N, C = 64, 16  # small synthetic shapes: 64 samples, 16 classes
    logits = jax.random.normal(k_logits, (N, C), dtype=jnp.float32) * 3.0
    labels = jax.random.randint(k_labels, (N,), 0, C, dtype=jnp.int32)

    # softmax path — small forced tiles + 2 chunks exercise the multi-tile grid,
    # chunked partials, the partial last tile, and the clamped overflow tile.
    ece = jax.block_until_ready(
        ece_loss(logits, labels, temperature=1.5, onevsrest=False, n_bins=15,
                 max_tile_rows=24, num_chunks=2))
    ece_r = jax.block_until_ready(
        ece_loss_ref(logits, labels, temperature=1.5, onevsrest=False, n_bins=15))
    assert ece.shape == (1,)
    assert jnp.allclose(ece, ece_r, atol=1e-5, rtol=1e-5), (ece, ece_r)

    # one-vs-rest path — default sizing collapses to a single full tile.
    ece2 = jax.block_until_ready(
        ece_loss(logits, labels, temperature=1.0, onevsrest=True, n_bins=15))
    ece2_r = jax.block_until_ready(
        ece_loss_ref(logits, labels, temperature=1.0, onevsrest=True, n_bins=15))
    assert jnp.allclose(ece2, ece2_r, atol=1e-5, rtol=1e-5), (ece2, ece2_r)

    print("KERNEL_OK")
</pallas_src>

<mosaic_0001>
module attributes {stable_mosaic.version = 11 : i64} {
  func.func @_ece_kernel(%arg0: i32, %arg1: i32, %arg2: memref<1xf32, #tpu.memory_space<smem>>, %arg3: memref<24x16xf32, #tpu.memory_space<vmem>>, %arg4: memref<24x1xi32, #tpu.memory_space<vmem>>, %arg5: memref<1x8x128xf32, #tpu.memory_space<vmem>>) attributes {dimension_semantics = [#tpu.dimension_semantics<parallel>, #tpu.dimension_semantics<arbitrary>], iteration_bounds = array<i64: 2, 2>, scalar_prefetch = 0 : i64, scratch_operands = 0 : i64, tpu.core_type = #tpu.core_type<tc>, window_params = [{transform_indices = @transform_0, window_bounds = array<i64: 1>}, {transform_indices = @transform_1, window_bounds = array<i64: 24, 16>}, {transform_indices = @transform_2, window_bounds = array<i64: 24, 1>}, {transform_indices = @transform_3, window_bounds = array<i64: 1, 8, 128>}]} {
    %c0_i32 = arith.constant 0 : i32
    %0 = arith.cmpi eq, %arg1, %c0_i32 : i32
    %1 = arith.extui %0 : i1 to i32
    %c0_i32_0 = arith.constant 0 : i32
    %2 = arith.cmpi ne, %1, %c0_i32_0 : i32
    scf.if %2 {
      %cst_22 = arith.constant 0.000000e+00 : f32
      %65 = vector.broadcast %cst_22 : f32 to vector<8x128xf32>
      %c0_23 = arith.constant 0 : index
      %c0_24 = arith.constant 0 : index
      %c0_25 = arith.constant 0 : index
      %66 = vector.load %arg5[%c0_23, %c0_24, %c0_25] : memref<1x8x128xf32, #tpu.memory_space<vmem>>, vector<1x8x128xf32>
      %67 = vector.shape_cast %66 : vector<1x8x128xf32> to vector<8x128xf32>
      %68 = vector.shape_cast %65 : vector<8x128xf32> to vector<1x8x128xf32>
      tpu.vector_store %arg5[%c0_23, %c0_24, %c0_25], %68 {strides = array<i32>} : memref<1x8x128xf32, #tpu.memory_space<vmem>>, vector<1x8x128xf32>,
    } else {
    }
    %c0 = arith.constant 0 : index
    %3 = memref.load %arg2[%c0] : memref<1xf32, #tpu.memory_space<smem>>
    %cst = arith.constant 1.000000e+00 : f32
    %4 = arith.divf %cst, %3 : f32
    %c0_1 = arith.constant 0 : index
    %c0_2 = arith.constant 0 : index
    %5 = vector.load %arg3[%c0_1, %c0_2] : memref<24x16xf32, #tpu.memory_space<vmem>>, vector<24x16xf32>
    %6 = vector.broadcast %4 : f32 to vector<24x16xf32>
    %7 = arith.mulf %5, %6 : vector<24x16xf32>
    %cst_3 = arith.constant dense<0xFF800000> : vector<24xf32>
    %8 = vector.multi_reduction <maximumf>, %7, %cst_3 [1] : vector<24x16xf32> to vector<24xf32>
    %9 = vector.shape_cast %8 : vector<24xf32> to vector<24x1xf32>
    %10 = vector.broadcast %9 : vector<24x1xf32> to vector<24x16xf32>
    %11 = arith.subf %7, %10 : vector<24x16xf32>
    %12 = math.exp %11 : vector<24x16xf32>
    %cst_4 = arith.constant dense<0.000000e+00> : vector<24xf32>
    %13 = vector.multi_reduction <add>, %12, %cst_4 [1] : vector<24x16xf32> to vector<24xf32>
    %14 = vector.shape_cast %13 : vector<24xf32> to vector<24x1xf32>
    %cst_5 = arith.constant 1.000000e+00 : f32
    %15 = vector.broadcast %cst_5 : f32 to vector<24x1xf32>
    %16 = arith.divf %15, %14 : vector<24x1xf32>
    %17 = tpu.iota {dimensions = array<i32: 1>} : vector<24x16xi32>
    %18 = vector.broadcast %9 : vector<24x1xf32> to vector<24x16xf32>
    %19 = arith.cmpf oeq, %7, %18 : vector<24x16xf32>
    %c16_i32 = arith.constant 16 : i32
    %20 = vector.broadcast %c16_i32 : i32 to vector<24x16xi32>
    %21 = arith.select %19, %17, %20 : vector<24x16xi1>, vector<24x16xi32>
    %cst_6 = arith.constant dense<2147483647> : vector<24xi32>
    %22 = vector.multi_reduction <minsi>, %21, %cst_6 [1] : vector<24x16xi32> to vector<24xi32>
    %23 = vector.shape_cast %22 : vector<24xi32> to vector<24x1xi32>
    %c0_7 = arith.constant 0 : index
    %c0_8 = arith.constant 0 : index
    %24 = vector.load %arg4[%c0_7, %c0_8] : memref<24x1xi32, #tpu.memory_space<vmem>>, vector<24x1xi32>
    %25 = arith.cmpi eq, %23, %24 : vector<24x1xi32>
    %26 = arith.extui %25 : vector<24x1xi1> to vector<24x1xi32>
    %27 = arith.sitofp %26 : vector<24x1xi32> to vector<24x1xf32>
    %c2_i32 = arith.constant 2 : i32
    %28 = arith.muli %arg0, %c2_i32 : i32
    %29 = arith.addi %28, %arg1 : i32
    %c24_i32 = arith.constant 24 : i32
    %30 = arith.muli %29, %c24_i32 : i32
    %31 = tpu.iota {dimensions = array<i32: 0>} : vector<24x1xi32>
    %32 = vector.broadcast %30 : i32 to vector<24x1xi32>
    %33 = arith.addi %32, %31 : vector<24x1xi32>
    %c64_i32 = arith.constant 64 : i32
    %34 = vector.broadcast %c64_i32 : i32 to vector<24x1xi32>
    %35 = arith.cmpi slt, %33, %34 : vector<24x1xi32>
    %cst_9 = arith.constant -1.000000e+00 : f32
    %36 = vector.broadcast %cst_9 : f32 to vector<24x1xf32>
    %37 = arith.select %35, %16, %36 : vector<24x1xi1>, vector<24x1xf32>
    %38 = tpu.iota {dimensions = array<i32: 1>} : vector<1x128xi32>
    %39 = arith.sitofp %38 : vector<1x128xi32> to vector<1x128xf32>
    %cst_10 = arith.constant 1.500000e+01 : f32
    %40 = vector.broadcast %cst_10 : f32 to vector<1x128xf32>
    %41 = arith.divf %39, %40 : vector<1x128xf32>
    %cst_11 = arith.constant 1.000000e+00 : f32
    %42 = vector.broadcast %cst_11 : f32 to vector<1x128xf32>
    %43 = arith.addf %39, %42 : vector<1x128xf32>
    %cst_12 = arith.constant 1.500000e+01 : f32
    %44 = vector.broadcast %cst_12 : f32 to vector<1x128xf32>
    %45 = arith.divf %43, %44 : vector<1x128xf32>
    %46 = vector.broadcast %37 : vector<24x1xf32> to vector<24x128xf32>
    %47 = vector.broadcast %41 : vector<1x128xf32> to vector<24x128xf32>
    %48 = arith.cmpf ogt, %46, %47 : vector<24x128xf32>
    %49 = vector.broadcast %37 : vector<24x1xf32> to vector<24x128xf32>
    %50 = vector.broadcast %45 : vector<1x128xf32> to vector<24x128xf32>
    %51 = arith.cmpf ole, %49, %50 : vector<24x128xf32>
    %52 = arith.andi %48, %51 : vector<24x128xi1>
    %53 = arith.extui %52 : vector<24x128xi1> to vector<24x128xi32>
    %54 = arith.sitofp %53 : vector<24x128xi32> to vector<24x128xf32>
    %cst_13 = arith.constant 1.000000e+00 : f32
    %55 = vector.broadcast %cst_13 : f32 to vector<24x1xf32>
    %cst_14 = arith.constant 0.000000e+00 : f32
    %56 = vector.broadcast %cst_14 : f32 to vector<24x5xf32>
    %57 = tpu.concatenate %55, %37, %27, %56 in 1 : vector<24x1xf32>, vector<24x1xf32>, vector<24x1xf32>, vector<24x5xf32> -> vector<24x8xf32>
    %c0_15 = arith.constant 0 : index
    %c0_16 = arith.constant 0 : index
    %c0_17 = arith.constant 0 : index
    %58 = vector.load %arg5[%c0_15, %c0_16, %c0_17] : memref<1x8x128xf32, #tpu.memory_space<vmem>>, vector<1x8x128xf32>
    %59 = vector.shape_cast %58 : vector<1x8x128xf32> to vector<8x128xf32>
    %cst_18 = arith.constant dense<0.000000e+00> : vector<8x128xf32>
    %60 = tpu.matmul %57, %54, %cst_18 {dimension_numbers = #tpu.dot_dimension_numbers<[0], [0], [1], [1], [0, 1, 1, 1], [], []>, precision = #tpu.contract_precision<fp32>} : vector<24x8xf32>, vector<24x128xf32>, vector<8x128xf32> -> vector<8x128xf32>
    %61 = arith.addf %59, %60 : vector<8x128xf32>
    %c0_19 = arith.constant 0 : index
    %c0_20 = arith.constant 0 : index
    %c0_21 = arith.constant 0 : index
    %62 = vector.load %arg5[%c0_19, %c0_20, %c0_21] : memref<1x8x128xf32, #tpu.memory_space<vmem>>, vector<1x8x128xf32>
    %63 = vector.shape_cast %62 : vector<1x8x128xf32> to vector<8x128xf32>
    %64 = vector.shape_cast %61 : vector<8x128xf32> to vector<1x8x128xf32>
    tpu.vector_store %arg5[%c0_19, %c0_20, %c0_21], %64 {strides = array<i32>} : memref<1x8x128xf32, #tpu.memory_space<vmem>>, vector<1x8x128xf32>,
    return
  }
  func.func @transform_0(%arg0: i32, %arg1: i32) -> i32 {
    %c0_i32 = arith.constant 0 : i32
    %c0_i32_0 = arith.constant 0 : i32
    return %c0_i32 : i32
  }
  func.func @transform_1(%arg0: i32, %arg1: i32) -> (i32, i32) {
    %c2_i32 = arith.constant 2 : i32
    %0 = arith.muli %arg0, %c2_i32 : i32
    %1 = arith.addi %0, %arg1 : i32
    %c2_i32_0 = arith.constant 2 : i32
    %2 = arith.minsi %1, %c2_i32_0 : i32
    %c0_i32 = arith.constant 0 : i32
    %c0_i32_1 = arith.constant 0 : i32
    return %2, %c0_i32 : i32, i32
  }
  func.func @transform_2(%arg0: i32, %arg1: i32) -> (i32, i32) {
    %c2_i32 = arith.constant 2 : i32
    %0 = arith.muli %arg0, %c2_i32 : i32
    %1 = arith.addi %0, %arg1 : i32
    %c2_i32_0 = arith.constant 2 : i32
    %2 = arith.minsi %1, %c2_i32_0 : i32
    %c0_i32 = arith.constant 0 : i32
    %c0_i32_1 = arith.constant 0 : i32
    return %2, %c0_i32 : i32, i32
  }
  func.func @transform_3(%arg0: i32, %arg1: i32) -> (i32, i32, i32) {
    %c0_i32 = arith.constant 0 : i32
    %c0_i32_0 = arith.constant 0 : i32
    %c0_i32_1 = arith.constant 0 : i32
    return %arg0, %c0_i32, %c0_i32_0 : i32, i32, i32
  }
}

</mosaic_0001>

<llo_original>
// kernel: tpu_custom_call.1
$region0: #{tpu_custom_call.1}
  #allocation0 [shape = 'u32[]', space=smem, size = 0x4, offset = 0x4, fixed_abs, tag = 'smem constant byte address 0x4 - core index']
  #allocation1 [shape = 'u32[72,128]{1,0:T(1,128)}', space=vmem, size = 0x9000, scoped, tag = 'internal scratch']
  #allocation2 [shape = 'f32[1]{0:T(128)S(6)}', space=smem, size = 0x200, scoped, tag = 'scoped memory for tpu_custom_call.1']
  %s0 = inlined_call_operand.<no memory space> [shape: f32[1], index: 0, kind: input, shape index: {}]
  %s1 = inlined_call_operand.vmem [shape: f32[64,16], index: 1, kind: input, shape index: {}]
  %s2 = inlined_call_operand.vmem [shape: s32[64,1], index: 2, kind: input, shape index: {}]
  %s3 = inlined_call_operand.hbm [shape: f32[2,8,128], index: 3, kind: output, shape index: {}]
  %s4 = sld [smem:[#allocation0]]
  $region49: #{tpu_custom_call.1} parent=0
    _
  %s6 = ssub.s32 1, %s4
  %s7 = scalar_select 0, %s6, %s4
  %8 = sst [smem:[#allocation2]] %s0
  $region1: #{tpu_custom_call.1} parent=0
    #allocation3 [shape = 'u8[8192]{0}', space=vmem, size = 0x2000, scoped, tag = 'output window, operand 0']
    #allocation4 [shape = 's32[2]{0}', space=sflag, size = 0x8, scoped, tag = 'scoped memory for tpu_custom_call.1']
    %9 = vsyncpa [#allocation4], 0
    %s10 = scalar_lea.sflag [#allocation4], 1
    %11 = vsyncpa %s10, 0
    loop: start=0, step=1, limit=6
    $region2: #{tpu_custom_call.1} parent=1 // loop_pre_header
      _
    $region3: #{tpu_custom_call.1} parent=1 // loop_header
      %s13 = sphi 0, %s17
      %p14 = scmp.ge.s32.totalorder %s13, 6
      %s20 = sphi 0, %s32
      %s21 = sphi 0, %s28
      %s22 = sphi 0, %s20
      %s23 = sphi 0, %s21
      %s24 = sphi 0, %s22
      %s25 = sphi 0, %s23
      %s33 = sphi 0, %s33
      %s35 = sphi 0, %s33
      %s36 = sphi 0, %s35
      %s50 = sphi 0, %s36
      %s64 = sphi 0, %s66
      %s67 = sphi 0, %s64
      %s68 = sphi 0, %s67
      %s84 = sphi 0, %s68
      %s98 = sphi 0, %s100
      %s101 = sphi 0, %s98
      %s102 = sphi 0, %s101
      %s118 = sphi 0, %s102
      %s124 = sphi 0, %s126
      %s127 = sphi 0, %s124
      %s128 = sphi 0, %s127
      %s144 = sphi 0, %s128
    $region4: #{tpu_custom_call.1} parent=1 // loop_header_branch
      %16 = sbr.rel (%p14) target = $region8
    $region5: #{tpu_custom_call.1} parent=1 // loop_body
      %s18 = ssub.s32 %s13, 1
      %s19 = ssub.s32 %s13, 2
      %s26 = sadd.s32 1, %s21
      %p27 = scmp.ge.s32.totalorder %s26, 2
      %s28 = scalar_select %p27, 0, %s26
      %s29 = sadd.s32 1, %s20
      %s30 = scalar_select %p27, %s29, %s20
      %p31 = scmp.ge.s32.totalorder %s30, 2
      %s32 = scalar_select %p31, 0, %s30
      %s34 = sadd.s32 %s33, 1
      %p37 = scmp.eq.s32.totalorder %s13, 3
      %p38 = scmp.ne.s32.totalorder %s33, %s35
      %p39 = scmp.eq.s32.totalorder %s13, 0
      %p40 = por %p38, %p39
      %p41 = scmp.ne.s32.totalorder %s33, %s35
      %p42 = scmp.eq.s32.totalorder %s18, 3
      %p43 = por %p41, %p42
      %p44 = scmp.ne.s32.totalorder %s35, %s36
      %p45 = scmp.eq.s32.totalorder %s18, 0
      %p46 = por %p44, %p45
      %p47 = scmp.ne.s32.totalorder %s35, %s36
      %p48 = scmp.eq.s32.totalorder %s19, 3
      %p49 = por %p47, %p48
      %p51 = scmp.ne.s32.totalorder %s36, %s50
      %p52 = scmp.eq.s32.totalorder %s19, 0
      %p53 = por %p51, %p52
      %s54 = smul.u32 %s20, 2
      %s55 = sadd.s32 %s54, %s21
      %p56 = scmp.lt.s32.totalorder %s55, 2
      %s57 = scalar_select %p56, %s55, 2
      %s58 = smul.u32 %s32, 2
      %s59 = sadd.s32 %s58, %s28
      %p60 = scmp.lt.s32.totalorder %s59, 2
      %s61 = scalar_select %p60, %s59, 2
      %s62 = ssub.s32 %s57, %s61
      %p63 = scmp.eq.s32.totalorder %s62, 0
      %s65 = sadd.s32 %s64, 1
      %s66 = scalar_select %p63, %s64, %s65
      %p69 = pneg %p63
      %p70 = scmp.eq.s32.totalorder %s13, 3
      %p71 = por %p69, %p70
      %p72 = scmp.ne.s32.totalorder %s64, %s67
      %p73 = scmp.eq.s32.totalorder %s13, 0
      %p74 = por %p72, %p73
      %p75 = scmp.ne.s32.totalorder %s64, %s67
      %p76 = scmp.eq.s32.totalorder %s18, 3
      %p77 = por %p75, %p76
      %p78 = scmp.ne.s32.totalorder %s67, %s68
      %p79 = scmp.eq.s32.totalorder %s18, 0
      %p80 = por %p78, %p79
      %p81 = scmp.ne.s32.totalorder %s67, %s68
      %p82 = scmp.eq.s32.totalorder %s19, 3
      %p83 = por %p81, %p82
      %p85 = scmp.ne.s32.totalorder %s68, %s84
      %p86 = scmp.eq.s32.totalorder %s19, 0
      %p87 = por %p85, %p86
      %s88 = smul.u32 %s20, 2
      %s89 = sadd.s32 %s88, %s21
      %p90 = scmp.lt.s32.totalorder %s89, 2
      %s91 = scalar_select %p90, %s89, 2
      %s92 = smul.u32 %s32, 2
      %s93 = sadd.s32 %s92, %s28
      %p94 = scmp.lt.s32.totalorder %s93, 2
      %s95 = scalar_select %p94, %s93, 2
      %s96 = ssub.s32 %s91, %s95
      %p97 = scmp.eq.s32.totalorder %s96, 0
      %s99 = sadd.s32 %s98, 1
      %s100 = scalar_select %p97, %s98, %s99
      %p103 = pneg %p97
      %p104 = scmp.eq.s32.totalorder %s13, 3
      %p105 = por %p103, %p104
      %p106 = scmp.ne.s32.totalorder %s98, %s101
      %p107 = scmp.eq.s32.totalorder %s13, 0
      %p108 = por %p106, %p107
      %p109 = scmp.ne.s32.totalorder %s98, %s101
      %p110 = scmp.eq.s32.totalorder %s18, 3
      %p111 = por %p109, %p110
      %p112 = scmp.ne.s32.totalorder %s101, %s102
      %p113 = scmp.eq.s32.totalorder %s18, 0
      %p114 = por %p112, %p113
      %p115 = scmp.ne.s32.totalorder %s101, %s102
      %p116 = scmp.eq.s32.totalorder %s19, 3
      %p117 = por %p115, %p116
      %p119 = scmp.ne.s32.totalorder %s102, %s118
      %p120 = scmp.eq.s32.totalorder %s19, 0
      %p121 = por %p119, %p120
      %s122 = ssub.s32 %s20, %s32
      %p123 = scmp.eq.s32.totalorder %s122, 0
      %s125 = sadd.s32 %s124, 1
      %s126 = scalar_select %p123, %s124, %s125
      %p129 = pneg %p123
      %p130 = scmp.eq.s32.totalorder %s13, 3
      %p131 = por %p129, %p130
      %p132 = scmp.ne.s32.totalorder %s124, %s127
      %p133 = scmp.eq.s32.totalorder %s13, 0
      %p134 = por %p132, %p133
      %p135 = scmp.ne.s32.totalorder %s124, %s127
      %p136 = scmp.eq.s32.totalorder %s18, 3
      %p137 = por %p135, %p136
      %p138 = scmp.ne.s32.totalorder %s127, %s128
      %p139 = scmp.eq.s32.totalorder %s18, 0
      %p140 = por %p138, %p139
      %p141 = scmp.ne.s32.totalorder %s127, %s128
      %p142 = scmp.eq.s32.totalorder %s19, 3
      %p143 = por %p141, %p142
      %p145 = scmp.ne.s32.totalorder %s128, %s144
      %p146 = scmp.eq.s32.totalorder %s19, 0
      %p147 = por %p145, %p146
      %p148 = scmp.le.s32.totalorder 1, %s13
      %p149 = scmp.lt.s32.totalorder %s13, 5
      %p150 = pnand %p148, %p149
      %p151 = pneg %p150
      // Predicated region
      $region9: #{tpu_custom_call.1} parent=5 // pred_check
        _
      $region10: #{tpu_custom_call.1} parent=5 // pred_check_branch
        %153 = sbr.rel (%p150) target = $region12
      $region11: #{tpu_custom_call.1} parent=5 // pred_region
        %s154 = ssub.s32 %s13, 1
        // Predicated region
        $region13: #{tpu_custom_call.1} parent=11 // pred_check
          %p155 = pneg %p46
        $region14: #{tpu_custom_call.1} parent=11 // pred_check_branch
          %157 = sbr.rel (%p155) target = $region16
        $region15: #{tpu_custom_call.1} parent=11 // pred_region
          _
        $region16: #{tpu_custom_call.1} parent=11 // pred_fallthru
          _
      $region12: #{tpu_custom_call.1} parent=5 // pred_fallthru
        _
      %p158 = scmp.lt.s32.totalorder %s13, 4
      // Predicated region
      $region17: #{tpu_custom_call.1} parent=5 // pred_check
        %p159 = pneg %p158
      $region18: #{tpu_custom_call.1} parent=5 // pred_check_branch
        %161 = sbr.rel (%p159) target = $region20
      $region19: #{tpu_custom_call.1} parent=5 // pred_region
        // Predicated region
        $region21: #{tpu_custom_call.1} parent=19 // pred_check
          %p162 = pneg %p74
        $region22: #{tpu_custom_call.1} parent=19 // pred_check_branch
          %164 = sbr.rel (%p162) target = $region24
        $region23: #{tpu_custom_call.1} parent=19 // pred_region
          %s165 = smul.u32 %s20, 2
          %s166 = sadd.s32 %s165, %s21
          %p167 = scmp.lt.s32.totalorder %s166, 2
          %s168 = scalar_select %p167, %s166, 2
          %s169 = smul.u32 3, %s168
          %s170 = ssub.s32 8, %s169
          %p171 = scmp.lt.s32.totalorder %s170, 3
          %s172 = scalar_select %p171, %s170, 3
          %s173 = smul.u32 8, %s172
          %p174 = scmp.lt.s32.totalorder %s169, 7
          %s175 = scalar_select %p174, %s169, 7
          %s176 = smul.addr %s175, 8
          %s177 = scalar_lea.vmem %s1, %s176
          %s178 = smul.u32 %s20, 2
          %s179 = sadd.s32 %s178, %s21
          %p180 = scmp.lt.s32.totalorder %s179, 2
          %s181 = scalar_select %p180, %s179, 2
          %s182 = smul.u32 3, %s181
          %s183 = ssub.s32 8, %s182
          %p184 = scmp.lt.s32.totalorder %s183, 3
          %s185 = scalar_select %p184, %s183, 3
          %s186 = smul.u32 8, %s185
        $region24: #{tpu_custom_call.1} parent=19 // pred_fallthru
          _
        // Predicated region
        $region25: #{tpu_custom_call.1} parent=19 // pred_check
          %p187 = pneg %p108
        $region26: #{tpu_custom_call.1} parent=19 // pred_check_branch
          %189 = sbr.rel (%p187) target = $region28
        $region27: #{tpu_custom_call.1} parent=19 // pred_region
          %s190 = smul.u32 %s20, 2
          %s191 = sadd.s32 %s190, %s21
          %p192 = scmp.lt.s32.totalorder %s191, 2
          %s193 = scalar_select %p192, %s191, 2
          %s194 = smul.u32 3, %s193
          %s195 = ssub.s32 8, %s194
          %p196 = scmp.lt.s32.totalorder %s195, 3
          %s197 = scalar_select %p196, %s195, 3
          %s198 = smul.u32 8, %s197
          %p199 = scmp.lt.s32.totalorder %s194, 7
          %s200 = scalar_select %p199, %s194, 7
          %s201 = smul.addr %s200, 8
          %s202 = scalar_lea.vmem %s2, %s201
          %s203 = smul.u32 %s20, 2
          %s204 = sadd.s32 %s203, %s21
          %p205 = scmp.lt.s32.totalorder %s204, 2
          %s206 = scalar_select %p205, %s204, 2
          %s207 = smul.u32 3, %s206
          %s208 = ssub.s32 8, %s207
          %p209 = scmp.lt.s32.totalorder %s208, 3
          %s210 = scalar_select %p209, %s208, 3
          %s211 = smul.u32 8, %s210
        $region28: #{tpu_custom_call.1} parent=19 // pred_fallthru
          _
      $region20: #{tpu_custom_call.1} parent=5 // pred_fallthru
        _
      %p212 = scmp.le.s32.totalorder 1, %s13
      %p213 = scmp.lt.s32.totalorder %s13, 5
      %p214 = pnand %p212, %p213
      %p215 = pneg %p214
      // Predicated region
      $region29: #{tpu_custom_call.1} parent=5 // pred_check
        _
      $region30: #{tpu_custom_call.1} parent=5 // pred_check_branch
        %217 = sbr.rel (%p214) target = $region32
      $region31: #{tpu_custom_call.1} parent=5 // pred_region
        %s218 = ssub.s32 %s13, 1
        %p219 = pneg %p46
        %p220 = pneg %p43
        %s221 = smul.u32 %s22, 2
        %s222 = sadd.s32 %s221, %s23
        %p223 = scmp.lt.s32.totalorder %s222, 2
        %s224 = scalar_select %p223, %s222, 2
        %s225 = smul.u32 3, %s224
        %s226 = ssub.s32 8, %s225
        %p227 = scmp.lt.s32.totalorder %s226, 3
        %s228 = scalar_select %p227, %s226, 3
        %s229 = smul.u32 8, %s228
        %p230 = scmp.lt.s32.totalorder %s225, 7
        %s231 = scalar_select %p230, %s225, 7
        %s232 = smul.addr %s231, 8
        %s233 = scalar_lea.vmem %s1, %s232
        %p234 = pneg %p80
        %p235 = pneg %p77
        %s236 = smul.u32 %s22, 2
        %s237 = sadd.s32 %s236, %s23
        %p238 = scmp.lt.s32.totalorder %s237, 2
        %s239 = scalar_select %p238, %s237, 2
        %s240 = smul.u32 3, %s239
        %s241 = ssub.s32 8, %s240
        %p242 = scmp.lt.s32.totalorder %s241, 3
        %s243 = scalar_select %p242, %s241, 3
        %s244 = smul.u32 8, %s243
        %p245 = scmp.lt.s32.totalorder %s240, 7
        %s246 = scalar_select %p245, %s240, 7
        %s247 = smul.addr %s246, 8
        %s248 = scalar_lea.vmem %s2, %s247
        %p249 = pneg %p114
        %p250 = pneg %p111
        %p251 = pneg %p140
        %p252 = pneg %p137
        %s253 = sand.u32 %s127, 1
        %s254 = scalar_lea.sflag [#allocation4], %s253
        %s255 = sand.u32 %s127, 1
        %s256 = smul.addr %s255, 8
        %s257 = scalar_lea.vmem [#allocation3], %s256
        %s258 = smul.u32 %s22, 2
        %s259 = sadd.s32 %s258, %s23
        %p260 = scmp.lt.s32.totalorder %s259, 2
        %s261 = scalar_select %p260, %s259, 2
        %s262 = smul.u32 3, %s261
        %s263 = ssub.s32 8, %s262
        %p264 = scmp.lt.s32.totalorder %s263, 3
        %s265 = scalar_select %p264, %s263, 3
        %s266 = smul.u32 8, %s265
        %p267 = scmp.lt.s32.totalorder %s262, 7
        %s268 = scalar_select %p267, %s262, 7
        %s269 = smul.addr %s268, 8
        %s270 = scalar_lea.vmem %s1, %s269
        %s271 = smul.u32 %s22, 2
        %s272 = sadd.s32 %s271, %s23
        %p273 = scmp.lt.s32.totalorder %s272, 2
        %s274 = scalar_select %p273, %s272, 2
        %s275 = smul.u32 3, %s274
        %s276 = ssub.s32 8, %s275
        %p277 = scmp.lt.s32.totalorder %s276, 3
        %s278 = scalar_select %p277, %s276, 3
        %s279 = smul.u32 8, %s278
        %s280 = smul.u32 %s22, 2
        %s281 = sadd.s32 %s280, %s23
        %p282 = scmp.lt.s32.totalorder %s281, 2
        %s283 = scalar_select %p282, %s281, 2
        %s284 = smul.u32 3, %s283
        %s285 = ssub.s32 8, %s284
        %p286 = scmp.lt.s32.totalorder %s285, 3
        %s287 = scalar_select %p286, %s285, 3
        %s288 = smul.u32 8, %s287
        %p289 = scmp.lt.s32.totalorder %s284, 7
        %s290 = scalar_select %p289, %s284, 7
        %s291 = smul.addr %s290, 8
        %s292 = scalar_lea.vmem %s2, %s291
        %s293 = smul.u32 %s22, 2
        %s294 = sadd.s32 %s293, %s23
        %p295 = scmp.lt.s32.totalorder %s294, 2
        %s296 = scalar_select %p295, %s294, 2
        %s297 = smul.u32 3, %s296
        %s298 = ssub.s32 8, %s297
        %p299 = scmp.lt.s32.totalorder %s298, 3
        %s300 = scalar_select %p299, %s298, 3
        %s301 = smul.u32 8, %s300
        %p302 = scmp.eq.s32.totalorder %s23, 0
        // Predicated region
        $region33: #{tpu_custom_call.1} parent=31 // pred_check
          %p303 = pneg %p302
        $region34: #{tpu_custom_call.1} parent=31 // pred_check_branch
          %305 = sbr.rel (%p303) target = $region36
        $region35: #{tpu_custom_call.1} parent=31 // pred_region
          %306 = vst [vmem:[%s257] sm:$0xff] 0.0
        $region36: #{tpu_custom_call.1} parent=31 // pred_fallthru
          _
        %s307 = sld [smem:[#allocation2]]
        %v308 = vstv %s307
        %v309 = vrcp.pop %v308
        %v310 = vmul.f32 %v308, %v309
        %v311 = vsub.f32 1.0, %v310
        %v312 = vmul.f32 %v309, %v311
        %v313 = vadd.f32 %v309, %v312
        %vm314 = vweird.f32 %v308
        %vm315 = vweird.f32 %v309
        %vm316 = vmor %vm314, %vm315
        %v317 = vsel %vm316, %v309, %v313
        %v318 = vand.u32 2147483647, %v308
        %vm319 = vcmp.eq.f32.partialorder %v318, 8.507059e+37
        %v320 = vand.u32 %v308, 2147483648
        %v321 = vor.u32 1.1754944e-38, %v320
        %v322 = vsel %vm319, %v321, %v317
        %s323 = vtos %v322
        %v324 = vld [vmem:[%s270] sm:$0xff]
        %v325 = vld [vmem:[%s270 + $0x8] sm:$0xff]
        %v326 = vld [vmem:[%s270 + $0x10] sm:$0xff]
        %v327 = vstv %s323
        %v328 = vmul.f32 %v324, %v327
        %v329 = vmul.f32 %v325, %v327
        %v330 = vmul.f32 %v326, %v327
        %vm331 = vcmask 130048
        %v332 = vsel %vm331, %v328, -inf
        %333 = vmax.xlane.f32.xlu0 %v332
        %v334 = vpop.xlane.xlu0 %333
        %v335 = vsel %vm331, %v329, -inf
        %336 = vmax.xlane.f32.xlu0 %v335
        %v337 = vpop.xlane.xlu0 %336
        %v338 = vsel %vm331, %v330, -inf
        %339 = vmax.xlane.f32.xlu0 %v338
        %v340 = vpop.xlane.xlu0 %339
        %v341 = vsub.f32 %v328, %v334
        %v342 = vsub.f32 %v329, %v337
        %v343 = vsub.f32 %v330, %v340
        %v344 = vmul.f32 %v341, 1.442695
        %v345 = vpow.pop %v344
        %v346 = vmul.f32 %v342, 1.442695
        %v347 = vpow.pop %v346
        %v348 = vmul.f32 %v343, 1.442695
        %v349 = vpow.pop %v348
        %v350 = vsel %vm331, %v345, 0.0
        %351 = vadd.xlane.f32.xlu0 %v350
        %v352 = vpop.xlane.xlu0 %351
        %v353 = vsel %vm331, %v347, 0.0
        %354 = vadd.xlane.f32.xlu0 %v353
        %v355 = vpop.xlane.xlu0 %354
        %v356 = vsel %vm331, %v349, 0.0
        %357 = vadd.xlane.f32.xlu0 %v356
        %v358 = vpop.xlane.xlu0 %357
        %v359 = vrcp.pop %v352
        %v360 = vmul.f32 %v352, %v359
        %v361 = vsub.f32 1.0, %v360
        %v362 = vmul.f32 %v359, %v361
        %v363 = vadd.f32 %v359, %v362
        %vm364 = vweird.f32 %v352
        %vm365 = vweird.f32 %v359
        %vm366 = vmor %vm364, %vm365
        %v367 = vsel %vm366, %v359, %v363
        %v368 = vand.u32 2147483647, %v352
        %vm369 = vcmp.eq.f32.partialorder %v368, 8.507059e+37
        %v370 = vand.u32 %v352, 2147483648
        %v371 = vor.u32 1.1754944e-38, %v370
        %v372 = vsel %vm369, %v371, %v367
        %v373 = vmul.f32 1.0, %v372
        %v374 = vrcp.pop %v355
        %v375 = vmul.f32 %v355, %v374
        %v376 = vsub.f32 1.0, %v375
        %v377 = vmul.f32 %v374, %v376
        %v378 = vadd.f32 %v374, %v377
        %vm379 = vweird.f32 %v355
        %vm380 = vweird.f32 %v374
        %vm381 = vmor %vm379, %vm380
        %v382 = vsel %vm381, %v374, %v378
        %v383 = vand.u32 2147483647, %v355
        %vm384 = vcmp.eq.f32.partialorder %v383, 8.507059e+37
        %v385 = vand.u32 %v355, 2147483648
        %v386 = vor.u32 1.1754944e-38, %v385
        %v387 = vsel %vm384, %v386, %v382
        %v388 = vmul.f32 1.0, %v387
        %v389 = vrcp.pop %v358
        %v390 = vmul.f32 %v358, %v389
        %v391 = vsub.f32 1.0, %v390
        %v392 = vmul.f32 %v389, %v391
        %v393 = vadd.f32 %v389, %v392
        %vm394 = vweird.f32 %v358
        %vm395 = vweird.f32 %v389
        %vm396 = vmor %vm394, %vm395
        %v397 = vsel %vm396, %v389, %v393
        %v398 = vand.u32 2147483647, %v358
        %vm399 = vcmp.eq.f32.partialorder %v398, 8.507059e+37
        %v400 = vand.u32 %v358, 2147483648
        %v401 = vor.u32 1.1754944e-38, %v400
        %v402 = vsel %vm399, %v401, %v397
        %v403 = vmul.f32 1.0, %v402
        %v404 = vlaneseq
        %v405 = vand.u32 %v404, 127
        %vm406 = vcmp.eq.f32.partialorder %v328, %v334
        %vm407 = vcmp.eq.f32.partialorder %v329, %v337
        %vm408 = vcmp.eq.f32.partialorder %v330, %v340
        %v409 = vsel %vm406, %v405, 16
        %v410 = vsel %vm407, %v405, 16
        %v411 = vsel %vm408, %v405, 16
        %v412 = vsel %vm331, %v409, 2147483647
        %v413 = vand.u32 %v412, 65535
        %v414 = vshra.s32 %v412, 16
        %v415 = vcvt.s32.f32 %v413
        %v416 = vcvt.s32.f32 %v414
        %417 = vmin.xlane.f32.xlu0 %v416
        %v418 = vpop.xlane.xlu0 %417
        %vm419 = vcmp.eq.f32.partialorder %v416, %v418
        %v420 = vsel %vm419, %v415, inf
        %421 = vmin.xlane.f32.xlu0 %v420
        %v422 = vpop.xlane.xlu0 %421
        %v423 = vcvt.f32.s32 %v422
        %v424 = vcvt.f32.s32 %v418
        %v425 = vshll.u32 %v424, 16
        %v426 = vadd.s32 %v425, %v423
        %v427 = vsel %vm331, %v410, 2147483647
        %v428 = vand.u32 %v427, 65535
        %v429 = vshra.s32 %v427, 16
        %v430 = vcvt.s32.f32 %v428
        %v431 = vcvt.s32.f32 %v429
        %432 = vmin.xlane.f32.xlu0 %v431
        %v433 = vpop.xlane.xlu0 %432
        %vm434 = vcmp.eq.f32.partialorder %v431, %v433
        %v435 = vsel %vm434, %v430, inf
        %436 = vmin.xlane.f32.xlu0 %v435
        %v437 = vpop.xlane.xlu0 %436
        %v438 = vcvt.f32.s32 %v437
        %v439 = vcvt.f32.s32 %v433
        %v440 = vshll.u32 %v439, 16
        %v441 = vadd.s32 %v440, %v438
        %v442 = vsel %vm331, %v411, 2147483647
        %v443 = vand.u32 %v442, 65535
        %v444 = vshra.s32 %v442, 16
        %v445 = vcvt.s32.f32 %v443
        %v446 = vcvt.s32.f32 %v444
        %447 = vmin.xlane.f32.xlu0 %v446
        %v448 = vpop.xlane.xlu0 %447
        %vm449 = vcmp.eq.f32.partialorder %v446, %v448
        %v450 = vsel %vm449, %v445, inf
        %451 = vmin.xlane.f32.xlu0 %v450
        %v452 = vpop.xlane.xlu0 %451
        %v453 = vcvt.f32.s32 %v452
        %v454 = vcvt.f32.s32 %v448
        %v455 = vshll.u32 %v454, 16
        %v456 = vadd.s32 %v455, %v453
        %v457 = vld [vmem:[%s292] sm:$0xff]
        %v458 = vld [vmem:[%s292 + $0x8] sm:$0xff]
        %v459 = vld [vmem:[%s292 + $0x10] sm:$0xff]
        %vm460 = vcmp.eq.s32.totalorder %v426, %v457
        %vm461 = vcmp.eq.s32.totalorder %v441, %v458
        %vm462 = vcmp.eq.s32.totalorder %v456, %v459
        %v463 = vsel %vm460, 1, 0
        %v464 = vsel %vm461, 1, 0
        %v465 = vsel %vm462, 1, 0
        %v466 = vcvt.s32.f32 %v463
        %v467 = vcvt.s32.f32 %v464
        %v468 = vcvt.s32.f32 %v465
        %s469 = smul.u32 %s22, 2
        %s470 = sadd.s32 %s469, %s23
        %s471 = smul.u32 %s470, 24
        %v472 = vlaneseq
        %v473 = vshrl.u32 %v472, 7
        %v474 = vadd.s32 %v473, 8
        %v475 = vadd.s32 %v473, 16
        %v476 = vstv %s471
        %v477 = vadd.s32 %v476, %v473
        %v478 = vadd.s32 %v476, %v474
        %v479 = vadd.s32 %v476, %v475
        %vm480 = vcmp.lt.s32.totalorder %v477, 64
        %vm481 = vcmp.lt.s32.totalorder %v478, 64
        %vm482 = vcmp.lt.s32.totalorder %v479, 64
        %v483 = vsel %vm480, %v373, -1.0
        %v484 = vsel %vm481, %v388, -1.0
        %v485 = vsel %vm482, %v403, -1.0
        %v486 = vcvt.s32.f32 %v405
        %v487 = vrcp.pop 15.0
        %v488 = vmul.f32 15.0, %v487
        %v489 = vsub.f32 1.0, %v488
        %v490 = vmul.f32 %v487, %v489
        %v491 = vadd.f32 %v487, %v490
        %vm492 = vweird.f32 %v487
        %v493 = vsel %vm492, %v487, %v491
        %v494 = vmul.f32 %v486, %v493
        %v495 = vadd.f32 %v486, 1.0
        %v496 = vmul.f32 %v495, %v493
        %vm497 = vcmp.gt.f32.partialorder %v483, %v494
        %vm498 = vcmp.gt.f32.partialorder %v484, %v494
        %vm499 = vcmp.gt.f32.partialorder %v485, %v494
        %vm500 = vcmp.le.f32.partialorder %v483, %v496
        %vm501 = vcmp.le.f32.partialorder %v484, %v496
        %vm502 = vcmp.le.f32.partialorder %v485, %v496
        %vm503 = vmand %vm497, %vm500
        %vm504 = vmand %vm498, %vm501
        %vm505 = vmand %vm499, %vm502
        %v506 = vsel %vm503, 1, 0
        %v507 = vsel %vm504, 1, 0
        %v508 = vsel %vm505, 1, 0
        %v509 = vcvt.s32.f32 %v506
        %v510 = vcvt.s32.f32 %v507
        %v511 = vcvt.s32.f32 %v508
        %515 = vrot.lane.b32.xlu0 %v466, 2
        %v516 = vpop.permute.xlu0 %515
        %517 = vrot.lane.b32.xlu0 %v467, 2
        %v518 = vpop.permute.xlu0 %517
        %519 = vrot.lane.b32.xlu0 %v468, 2
        %v520 = vpop.permute.xlu0 %519
        %vm524 = vcmask 7168
        %v525 = vsel %vm524, 1.0, %v483
        %v526 = vsel %vm524, 1.0, %v484
        %v527 = vsel %vm524, 1.0, %v485
        %vm528 = vcmask 15360
        %v529 = vsel %vm528, %v525, %v516
        %v530 = vsel %vm528, %v526, %v518
        %v531 = vsel %vm528, %v527, %v520
        %vm532 = vcmask 23552
        %v533 = vsel %vm532, %v529, 0.0
        %v534 = vsel %vm532, %v530, 0.0
        %v535 = vsel %vm532, %v531, 0.0
        %v536 = vld [vmem:[%s257] sm:$0xff]
        %537 = vxpose.xlu0.b32.start [1/16] %v533, 128
        %538 = vxpose.xlu0.b32.cont [2/16] %v534, 128
        %539 = vxpose.xlu0.b32.cont [3/16] %v535, 128
        %540 = vxpose.xlu0.b32.cont [4/16] 0.0, 128
        %541 = vxpose.xlu0.b32.cont [5/16] 0.0, 128
        %542 = vxpose.xlu0.b32.cont [6/16] 0.0, 128
        %543 = vxpose.xlu0.b32.cont [7/16] 0.0, 128
        %544 = vxpose.xlu0.b32.cont [8/16] 0.0, 128
        %545 = vxpose.xlu0.b32.cont [9/16] 0.0, 128
        %546 = vxpose.xlu0.b32.cont [10/16] 0.0, 128
        %547 = vxpose.xlu0.b32.cont [11/16] 0.0, 128
        %548 = vxpose.xlu0.b32.cont [12/16] 0.0, 128
        %549 = vxpose.xlu0.b32.cont [13/16] 0.0, 128
        %550 = vxpose.xlu0.b32.cont [14/16] 0.0, 128
        %551 = vxpose.xlu0.b32.cont [15/16] 0.0, 128
        %552 = vxpose.xlu0.b32.end [16/16] 0.0, 128
        %v553 = vpop.trf.xlu0
        %v554 = vpop.trf.xlu0
        %v555 = vpop.trf.xlu0
        %v556 = vpop.trf.xlu0
        %v557 = vpop.trf.xlu0
        %v558 = vpop.trf.xlu0
        %v559 = vpop.trf.xlu0
        %v560 = vpop.trf.xlu0
        %v561 = vpop.trf.xlu0
        %v562 = vpop.trf.xlu0
        %v563 = vpop.trf.xlu0
        %v564 = vpop.trf.xlu0
        %v565 = vpop.trf.xlu0
        %v566 = vpop.trf.xlu0
        %v567 = vpop.trf.xlu0
        %v568 = vpop.trf.xlu0
        %vm569 = vcmask 195584
        %v571 = vsel %vm569, %v553, 0
        %573 = vmatpush.msra.mxu0 0.0
        %574 = vmatpush.msra.mxu0 0.0
        %575 = vmatpush.msra.mxu0 0.0
        %576 = vmatpush.msra.mxu0 0.0
        %577 = vmatpush.msra.mxu0 0.0
        %578 = vmatpush.msra.mxu0 0.0
        %579 = vmatpush.msra.mxu0 0.0
        %580 = vmatpush.msra.mxu0 0.0
        %581 = vmatpush.msra.mxu0 0.0
        %582 = vmatpush.msra.mxu0 0.0
        %583 = vmatpush.msra.mxu0 0.0
        %584 = vmatpush.msra.mxu0 0.0
        %585 = vmatpush.msra.mxu0 0.0
        %v586 = vand.u32 %v511, 4294901760
        %587 = vmatpush.msra.mxu0 %v586
        %v588 = vand.u32 %v510, 4294901760
        %589 = vmatpush.msra.mxu0 %v588
        %v590 = vand.u32 %v509, 4294901760
        %591 = vmatpush.msra.mxu0 %v590
        %v592 = vand.u32 %v571, 4294901760
        %v593 = vsub.f32 %v571, %v592
        %v594 = vand.u32 %v593, 4294901760
        %v595 = vsub.f32 %v593, %v594
        %v596 = vand.u32 %v595, 4294901760
        %597 = vmatmul.f32.gmra.mxu0 %v596
        %v598 = vpop.f32.mrf.mxu0
        %v599 = vadd.f32 0.0, %v598
        %600 = vdwg.mxu0
        %601 = vmatpush.msra.mxu0 0.0
        %602 = vmatpush.msra.mxu0 0.0
        %603 = vmatpush.msra.mxu0 0.0
        %604 = vmatpush.msra.mxu0 0.0
        %605 = vmatpush.msra.mxu0 0.0
        %606 = vmatpush.msra.mxu0 0.0
        %607 = vmatpush.msra.mxu0 0.0
        %608 = vmatpush.msra.mxu0 0.0
        %609 = vmatpush.msra.mxu0 0.0
        %610 = vmatpush.msra.mxu0 0.0
        %611 = vmatpush.msra.mxu0 0.0
        %612 = vmatpush.msra.mxu0 0.0
        %613 = vmatpush.msra.mxu0 0.0
        %v614 = vand.u32 %v511, 4294901760
        %v615 = vsub.f32 %v511, %v614
        %v616 = vand.u32 %v615, 4294901760
        %v617 = vsub.f32 %v615, %v616
        %v618 = vand.u32 %v617, 4294901760
        %619 = vmatpush.msra.mxu0 %v618
        %v620 = vand.u32 %v510, 4294901760
        %v621 = vsub.f32 %v510, %v620
        %v622 = vand.u32 %v621, 4294901760
        %v623 = vsub.f32 %v621, %v622
        %v624 = vand.u32 %v623, 4294901760
        %625 = vmatpush.msra.mxu0 %v624
        %v626 = vand.u32 %v509, 4294901760
        %v627 = vsub.f32 %v509, %v626
        %v628 = vand.u32 %v627, 4294901760
        %v629 = vsub.f32 %v627, %v628
        %v630 = vand.u32 %v629, 4294901760
        %631 = vmatpush.msra.mxu0 %v630
        %v632 = vand.u32 %v571, 4294901760
        %633 = vmatmul.f32.gmra.mxu0 %v632
        %v634 = vpop.f32.mrf.mxu0
        %v635 = vadd.f32 %v599, %v634
        %636 = vdwg.mxu0
        %637 = vmatpush.msra.mxu0 0.0
        %638 = vmatpush.msra.mxu0 0.0
        %639 = vmatpush.msra.mxu0 0.0
        %640 = vmatpush.msra.mxu0 0.0
        %641 = vmatpush.msra.mxu0 0.0
        %642 = vmatpush.msra.mxu0 0.0
        %643 = vmatpush.msra.mxu0 0.0
        %644 = vmatpush.msra.mxu0 0.0
        %645 = vmatpush.msra.mxu0 0.0
        %646 = vmatpush.msra.mxu0 0.0
        %647 = vmatpush.msra.mxu0 0.0
        %648 = vmatpush.msra.mxu0 0.0
        %649 = vmatpush.msra.mxu0 0.0
        %v650 = vand.u32 %v511, 4294901760
        %v651 = vsub.f32 %v511, %v650
        %652 = vmatpush.msra.mxu0 %v651
        %v653 = vand.u32 %v510, 4294901760
        %v654 = vsub.f32 %v510, %v653
        %655 = vmatpush.msra.mxu0 %v654
        %v656 = vand.u32 %v509, 4294901760
        %v657 = vsub.f32 %v509, %v656
        %658 = vmatpush.msra.mxu0 %v657
        %v659 = vand.u32 %v571, 4294901760
        %v660 = vsub.f32 %v571, %v659
        %661 = vmatmul.f32.gmra.mxu0 %v660
        %v662 = vpop.f32.mrf.mxu0
        %v663 = vadd.f32 %v635, %v662
        %664 = vdwg.mxu0
        %665 = vmatpush.msra.mxu0 0.0
        %666 = vmatpush.msra.mxu0 0.0
        %667 = vmatpush.msra.mxu0 0.0
        %668 = vmatpush.msra.mxu0 0.0
        %669 = vmatpush.msra.mxu0 0.0
        %670 = vmatpush.msra.mxu0 0.0
        %671 = vmatpush.msra.mxu0 0.0
        %672 = vmatpush.msra.mxu0 0.0
        %673 = vmatpush.msra.mxu0 0.0
        %674 = vmatpush.msra.mxu0 0.0
        %675 = vmatpush.msra.mxu0 0.0
        %676 = vmatpush.msra.mxu0 0.0
        %677 = vmatpush.msra.mxu0 0.0
        %v678 = vand.u32 %v511, 4294901760
        %679 = vmatpush.msra.mxu0 %v678
        %v680 = vand.u32 %v510, 4294901760
        %681 = vmatpush.msra.mxu0 %v680
        %v682 = vand.u32 %v509, 4294901760
        %683 = vmatpush.msra.mxu0 %v682
        %v684 = vand.u32 %v571, 4294901760
        %v685 = vsub.f32 %v571, %v684
        %v686 = vand.u32 %v685, 4294901760
        %687 = vmatmul.f32.gmra.mxu0 %v686
        %v688 = vpop.f32.mrf.mxu0
        %v689 = vadd.f32 %v663, %v688
        %690 = vdwg.mxu0
        %691 = vmatpush.msra.mxu0 0.0
        %692 = vmatpush.msra.mxu0 0.0
        %693 = vmatpush.msra.mxu0 0.0
        %694 = vmatpush.msra.mxu0 0.0
        %695 = vmatpush.msra.mxu0 0.0
        %696 = vmatpush.msra.mxu0 0.0
        %697 = vmatpush.msra.mxu0 0.0
        %698 = vmatpush.msra.mxu0 0.0
        %699 = vmatpush.msra.mxu0 0.0
        %700 = vmatpush.msra.mxu0 0.0
        %701 = vmatpush.msra.mxu0 0.0
        %702 = vmatpush.msra.mxu0 0.0
        %703 = vmatpush.msra.mxu0 0.0
        %v704 = vand.u32 %v511, 4294901760
        %v705 = vsub.f32 %v511, %v704
        %v706 = vand.u32 %v705, 4294901760
        %707 = vmatpush.msra.mxu0 %v706
        %v708 = vand.u32 %v510, 4294901760
        %v709 = vsub.f32 %v510, %v708
        %v710 = vand.u32 %v709, 4294901760
        %711 = vmatpush.msra.mxu0 %v710
        %v712 = vand.u32 %v509, 4294901760
        %v713 = vsub.f32 %v509, %v712
        %v714 = vand.u32 %v713, 4294901760
        %715 = vmatpush.msra.mxu0 %v714
        %v716 = vand.u32 %v571, 4294901760
        %717 = vmatmul.f32.gmra.mxu0 %v716
        %v718 = vpop.f32.mrf.mxu0
        %v719 = vadd.f32 %v689, %v718
        %720 = vdwg.mxu0
        %721 = vmatpush.msra.mxu0 0.0
        %722 = vmatpush.msra.mxu0 0.0
        %723 = vmatpush.msra.mxu0 0.0
        %724 = vmatpush.msra.mxu0 0.0
        %725 = vmatpush.msra.mxu0 0.0
        %726 = vmatpush.msra.mxu0 0.0
        %727 = vmatpush.msra.mxu0 0.0
        %728 = vmatpush.msra.mxu0 0.0
        %729 = vmatpush.msra.mxu0 0.0
        %730 = vmatpush.msra.mxu0 0.0
        %731 = vmatpush.msra.mxu0 0.0
        %732 = vmatpush.msra.mxu0 0.0
        %733 = vmatpush.msra.mxu0 0.0
        %v734 = vand.u32 %v511, 4294901760
        %735 = vmatpush.msra.mxu0 %v734
        %v736 = vand.u32 %v510, 4294901760
        %737 = vmatpush.msra.mxu0 %v736
        %v738 = vand.u32 %v509, 4294901760
        %739 = vmatpush.msra.mxu0 %v738
        %v740 = vand.u32 %v571, 4294901760
        %741 = vmatmul.f32.gmra.mxu0 %v740
        %v742 = vpop.f32.mrf.mxu0
        %v743 = vadd.f32 %v719, %v742
        %744 = vdwg.mxu0
        %v745 = vadd.f32 %v536, %v743
        %746 = vst [vmem:[%s257] sm:$0xff] %v745
        %s747 = sand.u32 %s127, 1
        %s748 = scalar_lea.sflag [#allocation4], %s747
        %s749 = sand.u32 %s127, 1
        %s750 = smul.addr %s749, 8
        %s751 = scalar_lea.vmem [#allocation3], %s750
        // Predicated region
        $region37: #{tpu_custom_call.1} parent=31 // pred_check
          %p752 = pneg %p137
        $region38: #{tpu_custom_call.1} parent=31 // pred_check_branch
          %754 = sbr.rel (%p752) target = $region40
        $region39: #{tpu_custom_call.1} parent=31 // pred_region
          %756 = vsyncadd %s748, 0
          %s757 = smul.addr %s22, 8
          %s758 = scalar_lea.hbm %s3, %s757
          %s760 = sshll.u32 %s751, 4
          %s761 = int_to_ptr.vmem [resolvable:$true] %s760
          %s762 = sshll.u32 %s758, 4
          %s763 = int_to_ptr.hbm [resolvable:$true] %s762
          %765 = dma.vmem_to_hbm [thread:$0]  %s761, 128, %s763, %s748
        $region40: #{tpu_custom_call.1} parent=31 // pred_fallthru
          _
      $region32: #{tpu_custom_call.1} parent=5 // pred_fallthru
        _
      %p766 = scmp.le.s32.totalorder 2, %s13
      // Predicated region
      $region41: #{tpu_custom_call.1} parent=5 // pred_check
        %p767 = pneg %p766
      $region42: #{tpu_custom_call.1} parent=5 // pred_check_branch
        %769 = sbr.rel (%p767) target = $region44
      $region43: #{tpu_custom_call.1} parent=5 // pred_region
        %s770 = ssub.s32 %s13, 2
        // Predicated region
        $region45: #{tpu_custom_call.1} parent=43 // pred_check
          %p771 = pneg %p143
        $region46: #{tpu_custom_call.1} parent=43 // pred_check_branch
          %773 = sbr.rel (%p771) target = $region48
        $region47: #{tpu_custom_call.1} parent=43 // pred_region
          %s774 = sand.u32 %s128, 1
          %s775 = scalar_lea.sflag [#allocation4], %s774
          %s776 = sand.u32 %s128, 1
          %s777 = smul.addr %s776, 8
          %s778 = scalar_lea.vmem [#allocation3], %s777
          %780 = dma.done %s775, 128
        $region48: #{tpu_custom_call.1} parent=43 // pred_fallthru
          _
      $region44: #{tpu_custom_call.1} parent=5 // pred_fallthru
        _
    $region6: #{tpu_custom_call.1} parent=1 // loop_footer
      %s17 = sadd.s32 1, %s13
    $region7: #{tpu_custom_call.1} parent=1 // loop_footer_branch
      %12 = sbr.rel target = $region3
    $region8: #{tpu_custom_call.1} parent=1 // loop_exit
      _
    %781 = vsyncpa [#allocation4], 1
    %s782 = scalar_lea.sflag [#allocation4], 1
    %783 = vsyncpa %s782, 1

</llo_original>
